<compile_context>
chip_gen: v5e
topology: v5e:2x2
jax: 0.10.0
libtpu: 0.0.40
codegen_flags: <defaults>
</compile_context>

<pallas_src>
import functools

import jax
import jax.numpy as jnp
from jax.experimental import pallas as pl
from jax.experimental.pallas import tpu as pltpu

_LANES = 128
_SUBLANES = 8
_ROW_TILE = _SUBLANES * _LANES          # 1024 elements = one (8, 128) f32 tile
_BLOCK_BYTES = 4 * 1024 * 1024          # ~4 MiB per input per pipeline buffer
_VMEM_LIMIT = 48 * 1024 * 1024          # 2 inputs x 2 buffers x 4 MiB + temps


def _num_tensorcores() -> int:
    """2 on v7x-class chips (two TensorCores per chip), else 1 (v5e / v6e)."""
    try:
        kind = jax.devices()[0].device_kind.lower()
    except Exception:
        return 1
    return 2 if ("v7" in kind or "7x" in kind) else 1


def _mse_kernel(a_ref, b_ref, o_ref, acc_ref, *,
                block_rows, m_rows, steps_per_core, need_mask):
    c = pl.program_id(0)        # core-split index
    i = pl.program_id(1)        # streaming step within this core's share

    @pl.when(i == 0)
    def _():
        acc_ref[...] = jnp.zeros_like(acc_ref)

    d = a_ref[...].astype(jnp.float32) - b_ref[...].astype(jnp.float32)
    sq = d * d

    if need_mask:
        # Boundary / clamped out-of-range blocks read Pallas-padded or stale
        # data of unspecified value; the select (NOT a multiply) discards it,
        # including NaN/Inf garbage.
        row0 = (c * steps_per_core + i) * block_rows
        rows = row0 + jax.lax.broadcasted_iota(jnp.int32, sq.shape, 0)
        sq = jnp.where(rows < m_rows, sq, 0.0)

    # Fold the block into the persistent (8, 128) accumulator: pure VPU adds,
    # no per-step cross-lane reduction and no per-step scalar serialization.
    acc_ref[...] += sq.reshape(block_rows // _SUBLANES, _SUBLANES, _LANES).sum(axis=0)

    @pl.when(i == steps_per_core - 1)
    def _():
        # One cross-lane/sublane reduction per core, once per kernel.
        o_ref[0, 0] = jnp.sum(acc_ref[...])


def mse_loss(pre_offset, label, *, xla_fallback_elems=0):
    """Pallas TPU implementation of torch.mean((pre_offset - label) ** 2).

    Set `xla_fallback_elems` to ~1e5 to let plain XLA handle tiny inputs where
    kernel-launch overhead dominates (default 0 => always run the kernel).
    """
    assert pre_offset.shape == label.shape, "shapes must match"
    n = int(pre_offset.size)
    assert n > 0, "empty input"

    a = jnp.ravel(pre_offset)       # free reshape; native dtype (cast in-kernel)
    b = jnp.ravel(label)

    # 1024-aligned prefix streamed by the kernel; <1024-element ragged tail is
    # one tiny jnp.sum in the wrapper (no full-array pad / copy).
    n_main = (n // _ROW_TILE) * _ROW_TILE
    tail = n - n_main

    if n <= xla_fallback_elems or n_main == 0:
        d = a.astype(jnp.float32) - b.astype(jnp.float32)
        return jnp.sum(d * d) / jnp.float32(n)

    tail_sum = jnp.float32(0.0)
    if tail:
        dt = a[n_main:].astype(jnp.float32) - b[n_main:].astype(jnp.float32)
        tail_sum = jnp.sum(dt * dt)
        a = a[:n_main]
        b = b[:n_main]

    m_rows = n_main // _LANES                       # multiple of 8
    a2 = a.reshape(m_rows, _LANES)
    b2 = b.reshape(m_rows, _LANES)

    # Block rows scaled so each input block is ~_BLOCK_BYTES regardless of dtype
    # (8192 rows for f32, 16384 for bf16, ...); always a multiple of 8.
    dtype_bytes = jnp.dtype(pre_offset.dtype).itemsize
    max_block_rows = max(_SUBLANES, _BLOCK_BYTES // (_LANES * dtype_bytes))
    block_rows = min(max_block_rows, m_rows)
    num_blocks = -(-m_rows // block_rows)

    # Core split only where it buys real parallelism (v7x: 2 TCs) and there is
    # more than one block to share; on 1-TC chips it would only add masked,
    # redundant steps and clamped re-reads.
    core_split = _num_tensorcores() if num_blocks >= 2 else 1
    steps_per_core = -(-num_blocks // core_split)
    need_mask = (core_split * steps_per_core * block_rows) != m_rows
    last_block = num_blocks - 1

    if core_split > 1:
        core_sem = getattr(pltpu, "CORE_PARALLEL", "parallel")
    else:
        core_sem = "arbitrary"

    def in_map(c, i):
        # Clamp so out-of-range steps re-read the last valid block (masked away).
        return (jnp.minimum(c * steps_per_core + i, last_block), 0)

    kernel = functools.partial(
        _mse_kernel,
        block_rows=block_rows,
        m_rows=m_rows,
        steps_per_core=steps_per_core,
        need_mask=need_mask,
    )

    partials = pl.pallas_call(
        kernel,
        out_shape=jax.ShapeDtypeStruct((core_split, 1), jnp.float32),
        grid_spec=pltpu.PrefetchScalarGridSpec(
            num_scalar_prefetch=0,
            grid=(core_split, steps_per_core),
            in_specs=[
                pl.BlockSpec((block_rows, _LANES), in_map),
                pl.BlockSpec((block_rows, _LANES), in_map),
            ],
            out_specs=pl.BlockSpec(
                (1, 1), lambda c, i: (c, 0), memory_space=pltpu.SMEM
            ),
            scratch_shapes=[pltpu.VMEM((_SUBLANES, _LANES), jnp.float32)],
        ),
        compiler_params=pltpu.CompilerParams(
            dimension_semantics=(core_sem, "arbitrary"),
            vmem_limit_bytes=_VMEM_LIMIT,
        ),
        cost_estimate=pl.CostEstimate(
            flops=3 * n_main,
            transcendentals=0,
            bytes_accessed=2 * n_main * dtype_bytes + 4 * core_split,
        ),
    )(a2, b2)

    # Combine per-core partial sums + ragged tail; normalize by true count.
    return (jnp.sum(partials) + tail_sum) / jnp.float32(n)


if __name__ == "__main__":
    key = jax.random.PRNGKey(0)
    k1, k2 = jax.random.split(key)

    # Small shape consistent with an offset-regression head: (batch, C, H, W).
    pre_offset = jax.random.normal(k1, (2, 4, 16, 16), dtype=jnp.float32)
    label = jax.random.normal(k2, (2, 4, 16, 16), dtype=jnp.float32)

    loss = jax.block_until_ready(mse_loss(pre_offset, label))
    ref = jnp.mean((pre_offset - label) ** 2)
    assert jnp.allclose(loss, ref, rtol=1e-5, atol=1e-6), (loss, ref)

    # Larger ragged input: exercises multi-block streaming, the boundary mask
    # and the wrapper-side tail (size not a multiple of 1024).
    k3, k4 = jax.random.split(k2)
    a_big = jax.random.normal(k3, (1237, 1051), dtype=jnp.float32)
    b_big = jax.random.normal(k4, (1237, 1051), dtype=jnp.float32)
    loss_big = jax.block_until_ready(mse_loss(a_big, b_big))
    ref_big = jnp.mean((a_big - b_big) ** 2)
    assert jnp.allclose(loss_big, ref_big, rtol=1e-4, atol=1e-6), (loss_big, ref_big)

    print("KERNEL_OK")
</pallas_src>

<mosaic_0001>
module attributes {stable_mosaic.version = 11 : i64} {
  func.func @_mse_kernel(%arg0: i32, %arg1: i32, %arg2: memref<16x128xf32, #tpu.memory_space<vmem>>, %arg3: memref<16x128xf32, #tpu.memory_space<vmem>>, %arg4: memref<1x1xf32, #tpu.memory_space<smem>>, %arg5: memref<8x128xf32, #tpu.memory_space<vmem>>) attributes {dimension_semantics = [#tpu.dimension_semantics<arbitrary>, #tpu.dimension_semantics<arbitrary>], iteration_bounds = array<i64: 1, 1>, scalar_prefetch = 0 : i64, scratch_operands = 1 : i64, tpu.core_type = #tpu.core_type<tc>, window_params = [{transform_indices = @transform_0, window_bounds = array<i64: 16, 128>}, {transform_indices = @transform_1, window_bounds = array<i64: 16, 128>}, {transform_indices = @transform_2, window_bounds = array<i64: 1, 1>}]} {
    %c0_i32 = arith.constant 0 : i32
    %0 = arith.cmpi eq, %arg1, %c0_i32 : i32
    %1 = arith.extui %0 : i1 to i32
    %c0_i32_0 = arith.constant 0 : i32
    %2 = arith.cmpi ne, %1, %c0_i32_0 : i32
    scf.if %2 {
      %cst_10 = arith.constant 0.000000e+00 : f32
      %15 = vector.broadcast %cst_10 : f32 to vector<8x128xf32>
      %c0_11 = arith.constant 0 : index
      %c0_12 = arith.constant 0 : index
      %16 = vector.load %arg5[%c0_11, %c0_12] : memref<8x128xf32, #tpu.memory_space<vmem>>, vector<8x128xf32>
      tpu.vector_store %arg5[%c0_11, %c0_12], %15 {strides = array<i32>} : memref<8x128xf32, #tpu.memory_space<vmem>>, vector<8x128xf32>,
    } else {
    }
    %c0 = arith.constant 0 : index
    %c0_1 = arith.constant 0 : index
    %3 = vector.load %arg2[%c0, %c0_1] : memref<16x128xf32, #tpu.memory_space<vmem>>, vector<16x128xf32>
    %c0_2 = arith.constant 0 : index
    %c0_3 = arith.constant 0 : index
    %4 = vector.load %arg3[%c0_2, %c0_3] : memref<16x128xf32, #tpu.memory_space<vmem>>, vector<16x128xf32>
    %5 = arith.subf %3, %4 : vector<16x128xf32>
    %6 = arith.mulf %5, %5 : vector<16x128xf32>
    %c0_4 = arith.constant 0 : index
    %c0_5 = arith.constant 0 : index
    %7 = vector.load %arg5[%c0_4, %c0_5] : memref<8x128xf32, #tpu.memory_space<vmem>>, vector<8x128xf32>
    %8 = vector.shape_cast %6 : vector<16x128xf32> to vector<2x8x128xf32>
    %cst = arith.constant dense<0.000000e+00> : vector<8x128xf32>
    %9 = vector.multi_reduction <add>, %8, %cst [0] : vector<2x8x128xf32> to vector<8x128xf32>
    %10 = arith.addf %7, %9 : vector<8x128xf32>
    %c0_6 = arith.constant 0 : index
    %c0_7 = arith.constant 0 : index
    %11 = vector.load %arg5[%c0_6, %c0_7] : memref<8x128xf32, #tpu.memory_space<vmem>>, vector<8x128xf32>
    tpu.vector_store %arg5[%c0_6, %c0_7], %10 {strides = array<i32>} : memref<8x128xf32, #tpu.memory_space<vmem>>, vector<8x128xf32>,
    %c0_i32_8 = arith.constant 0 : i32
    %12 = arith.cmpi eq, %arg1, %c0_i32_8 : i32
    %13 = arith.extui %12 : i1 to i32
    %c0_i32_9 = arith.constant 0 : i32
    %14 = arith.cmpi ne, %13, %c0_i32_9 : i32
    scf.if %14 {
      %c0_10 = arith.constant 0 : index
      %c0_11 = arith.constant 0 : index
      %15 = vector.load %arg5[%c0_10, %c0_11] : memref<8x128xf32, #tpu.memory_space<vmem>>, vector<8x128xf32>
      %16 = vector.shape_cast %15 : vector<8x128xf32> to vector<1x8x128xf32>
      %cst_12 = arith.constant dense<0.000000e+00> : vector<1xf32>
      %17 = vector.multi_reduction <add>, %16, %cst_12 [1, 2] : vector<1x8x128xf32> to vector<1xf32>
      %18 = vector.shape_cast %17 : vector<1xf32> to vector<1x1x1xf32>
      %19 = vector.extract %18[0, 0, 0] : f32 from vector<1x1x1xf32>
      %c0_13 = arith.constant 0 : index
      %c0_14 = arith.constant 0 : index
      %20 = memref.load %arg4[%c0_13, %c0_14] : memref<1x1xf32, #tpu.memory_space<smem>>
      memref.store %19, %arg4[%c0_13, %c0_14] : memref<1x1xf32, #tpu.memory_space<smem>>
    } else {
    }
    return
  }
  func.func @transform_0(%arg0: i32, %arg1: i32) -> (i32, i32) {
    %c1_i32 = arith.constant 1 : i32
    %0 = arith.muli %arg0, %c1_i32 : i32
    %1 = arith.addi %0, %arg1 : i32
    %c0_i32 = arith.constant 0 : i32
    %2 = arith.minsi %1, %c0_i32 : i32
    %c0_i32_0 = arith.constant 0 : i32
    %c0_i32_1 = arith.constant 0 : i32
    return %2, %c0_i32_0 : i32, i32
  }
  func.func @transform_1(%arg0: i32, %arg1: i32) -> (i32, i32) {
    %c1_i32 = arith.constant 1 : i32
    %0 = arith.muli %arg0, %c1_i32 : i32
    %1 = arith.addi %0, %arg1 : i32
    %c0_i32 = arith.constant 0 : i32
    %2 = arith.minsi %1, %c0_i32 : i32
    %c0_i32_0 = arith.constant 0 : i32
    %c0_i32_1 = arith.constant 0 : i32
    return %2, %c0_i32_0 : i32, i32
  }
  func.func @transform_2(%arg0: i32, %arg1: i32) -> (i32, i32) {
    %c0_i32 = arith.constant 0 : i32
    %c0_i32_0 = arith.constant 0 : i32
    return %arg0, %c0_i32 : i32, i32
  }
}

</mosaic_0001>

<llo_original>
// kernel: tpu_custom_call.1
$region0: #{tpu_custom_call.1}
  #allocation0 [shape = 'u32[]', space=smem, size = 0x4, offset = 0x4, fixed_abs, tag = 'smem constant byte address 0x4 - core index']
  #allocation1 [shape = 'u32[72,128]{1,0:T(1,128)}', space=vmem, size = 0x9000, scoped, tag = 'internal scratch']
  #allocation2 [shape = 'f32[8,128]{1,0:T(8,128)}', space=vmem, size = 0x1000, scoped, tag = 'scratch operand']
  %s0 = inlined_call_operand.hbm [shape: f32[16,128], index: 0, kind: input, shape index: {}]
  %s1 = inlined_call_operand.hbm [shape: f32[16,128], index: 1, kind: input, shape index: {}]
  %s2 = inlined_call_operand.hbm [shape: f32[1,1], index: 2, kind: output, shape index: {}]
  %s3 = sld [smem:[#allocation0]]
  $region34: #{tpu_custom_call.1} parent=0
    _
  %s5 = ssub.s32 1, %s3
  %s6 = scalar_select 0, %s5, %s3
  $region1: #{tpu_custom_call.1} parent=0
    #allocation3 [shape = 'u8[8192]{0}', space=vmem, size = 0x2000, scoped, tag = 'input window, operand 0, single buffered']
    #allocation4 [shape = 's32[1]{0}', space=sflag, size = 0x4, scoped, tag = 'scoped memory for tpu_custom_call.1']
    #allocation5 [shape = 's32[1]{0}', space=sflag, size = 0x4, scoped, tag = 'scoped memory for tpu_custom_call.1']
    #allocation6 [shape = 'u8[8192]{0}', space=vmem, size = 0x2000, scoped, tag = 'input window, operand 1, single buffered']
    #allocation7 [shape = 's32[1]{0}', space=sflag, size = 0x4, scoped, tag = 'scoped memory for tpu_custom_call.1']
    #allocation8 [shape = 'u8[512]{0}', space=smem, size = 0x200, scoped, tag = 'output window, operand 0, single buffered']
    %7 = vsyncpa [#allocation4], 0
    %8 = vsyncpa [#allocation7], 0
    %9 = vsyncpa [#allocation5], 0
    // Predicated region
    $region2: #{tpu_custom_call.1} parent=1 // pred_check
      _
    $region3: #{tpu_custom_call.1} parent=1 // pred_check_branch
      %11 = sbr.rel (0) target = $region5
    $region4: #{tpu_custom_call.1} parent=1 // pred_region
      %s12 = sadd.s32 0, 0
      %p13 = scmp.lt.s32.totalorder %s12, 0
      %s14 = scalar_select %p13, %s12, 0
      %s15 = smul.u32 2, %s14
      %17 = vsyncadd [#allocation4], 0
      %s18 = smul.addr %s15, 8
      %s19 = scalar_lea.hbm %s0, %s18
      %s20 = sshll.u32 %s19, 4
      %s21 = int_to_ptr.hbm [resolvable:$true] %s20
      %s22 = sshll.u32 [#allocation3], 4
      %s23 = int_to_ptr.vmem [resolvable:$true] %s22
      %28 = dma.hbm_to_vmem [thread:$0]  %s21, 256, %s23, [#allocation4], 128, 128, 8
    $region5: #{tpu_custom_call.1} parent=1 // pred_fallthru
      _
    // Predicated region
    $region6: #{tpu_custom_call.1} parent=1 // pred_check
      _
    $region7: #{tpu_custom_call.1} parent=1 // pred_check_branch
      %30 = sbr.rel (0) target = $region9
    $region8: #{tpu_custom_call.1} parent=1 // pred_region
      %s31 = sadd.s32 0, 0
      %p32 = scmp.lt.s32.totalorder %s31, 0
      %s33 = scalar_select %p32, %s31, 0
      %s34 = smul.u32 2, %s33
      %36 = vsyncadd [#allocation7], 0
      %s37 = smul.addr %s34, 8
      %s38 = scalar_lea.hbm %s1, %s37
      %s39 = sshll.u32 %s38, 4
      %s40 = int_to_ptr.hbm [resolvable:$true] %s39
      %s41 = sshll.u32 [#allocation6], 4
      %s42 = int_to_ptr.vmem [resolvable:$true] %s41
      %47 = dma.hbm_to_vmem [thread:$0]  %s40, 256, %s42, [#allocation7], 128, 128, 8
    $region9: #{tpu_custom_call.1} parent=1 // pred_fallthru
      _
    // Predicated region
    $region10: #{tpu_custom_call.1} parent=1 // pred_check
      _
    $region11: #{tpu_custom_call.1} parent=1 // pred_check_branch
      %49 = sbr.rel (0) target = $region13
    $region12: #{tpu_custom_call.1} parent=1 // pred_region
      %51 = dma.done [#allocation4], 256
    $region13: #{tpu_custom_call.1} parent=1 // pred_fallthru
      _
    // Predicated region
    $region14: #{tpu_custom_call.1} parent=1 // pred_check
      _
    $region15: #{tpu_custom_call.1} parent=1 // pred_check_branch
      %53 = sbr.rel (0) target = $region17
    $region16: #{tpu_custom_call.1} parent=1 // pred_region
      %55 = dma.done [#allocation7], 256
    $region17: #{tpu_custom_call.1} parent=1 // pred_fallthru
      _
    %s56 = sadd.s32 0, 0
    %p57 = scmp.lt.s32.totalorder %s56, 0
    %s58 = scalar_select %p57, %s56, 0
    %s59 = smul.u32 2, %s58
    %s60 = sadd.s32 0, 0
    %p61 = scmp.lt.s32.totalorder %s60, 0
    %s62 = scalar_select %p61, %s60, 0
    %s63 = smul.u32 2, %s62
    %p64 = scmp.eq.s32.totalorder 0, 0
    // Predicated region
    $region18: #{tpu_custom_call.1} parent=1 // pred_check
      %p65 = pneg %p64
    $region19: #{tpu_custom_call.1} parent=1 // pred_check_branch
      %67 = sbr.rel (%p65) target = $region21
    $region20: #{tpu_custom_call.1} parent=1 // pred_region
      %68 = vst [vmem:[#allocation2] sm:$0xff] 0.0
    $region21: #{tpu_custom_call.1} parent=1 // pred_fallthru
      _
    %v69 = vld [vmem:[#allocation3] sm:$0xff]
    %v70 = vld [vmem:[#allocation3 + $0x8] sm:$0xff]
    %v71 = vld [vmem:[#allocation6] sm:$0xff]
    %v72 = vld [vmem:[#allocation6 + $0x8] sm:$0xff]
    %v73 = vsub.f32 %v69, %v71
    %v74 = vsub.f32 %v70, %v72
    %v75 = vmul.f32 %v73, %v73
    %v76 = vmul.f32 %v74, %v74
    %v77 = vld [vmem:[#allocation2] sm:$0xff]
    %v78 = vadd.f32 %v75, %v76
    %v79 = vadd.f32 %v77, %v78
    %80 = vst [vmem:[#allocation2] sm:$0xff] %v79
    // Predicated region
    $region22: #{tpu_custom_call.1} parent=1 // pred_check
      %p81 = pneg %p64
    $region23: #{tpu_custom_call.1} parent=1 // pred_check_branch
      %83 = sbr.rel (%p81) target = $region25
    $region24: #{tpu_custom_call.1} parent=1 // pred_region
      %v84 = vld [vmem:[#allocation2] sm:$0xff]
      %85 = vadd.xlane.f32.xlu0 %v84
      %v86 = vpop.xlane.xlu0 %85
      %v87 = vrot.slane %v86, 4
      %v88 = vadd.f32 %v86, %v87
      %v89 = vrot.slane %v88, 2
      %v90 = vadd.f32 %v88, %v89
      %v91 = vrot.slane %v90, 1
      %v92 = vadd.f32 %v90, %v91
      %s93 = vtos %v92
      %s94 = scalar_lea.smem [#allocation8], 0
      %95 = sst [smem:[%s94]] %s93
    $region25: #{tpu_custom_call.1} parent=1 // pred_fallthru
      _
    // Predicated region
    $region26: #{tpu_custom_call.1} parent=1 // pred_check
      _
    $region27: #{tpu_custom_call.1} parent=1 // pred_check_branch
      %97 = sbr.rel (0) target = $region29
    $region28: #{tpu_custom_call.1} parent=1 // pred_region
      %99 = vsyncadd [#allocation5], 0
      %s101 = sshll.u32 %s2, 4
      %s102 = int_to_ptr.hbm [resolvable:$true] %s101
      %104 = dma.smem_to_hbm [#allocation8], 16, %s102, [#allocation5]
    $region29: #{tpu_custom_call.1} parent=1 // pred_fallthru
      _
    // Predicated region
    $region30: #{tpu_custom_call.1} parent=1 // pred_check
      _
    $region31: #{tpu_custom_call.1} parent=1 // pred_check_branch
      %106 = sbr.rel (0) target = $region33
    $region32: #{tpu_custom_call.1} parent=1 // pred_region
      %108 = dma.done [#allocation5], 16
    $region33: #{tpu_custom_call.1} parent=1 // pred_fallthru
      _
    %109 = sfence
    %110 = vsyncpa [#allocation4], 1
    %111 = vsyncpa [#allocation7], 1
    %112 = vsyncpa [#allocation5], 1

</llo_original>
